<compile_context>
chip_gen: v6e
topology: v6e:2x2x1
jax: 0.10.0
libtpu: 0.0.40
codegen_flags: <defaults>
</compile_context>

<pallas_src>
import jax
import jax.numpy as jnp
from jax import lax
from jax.experimental import pallas as pl
from jax.experimental.pallas import tpu as pltpu


def mlp_kernel(x_ref, w1_ref, w2_ref, w3_ref, b_ref, o_ref):
    H1 = w1_ref.shape[0]
    H2 = w2_ref.shape[0]

    # One concatenated bias column (H1 + H2 + 1, 1); keep elementwise math in f32.
    b = b_ref[...].astype(jnp.float32)
    b1 = b[0:H1, :]                     # (H1, 1)
    b2 = b[H1:H1 + H2, :]               # (H2, 1)
    b3 = b[H1 + H2:H1 + H2 + 1, :]      # (1, 1)

    # x tile arrives in its natural (bt, D_in) layout (no HBM transpose pre-pass).
    # Cast to the weight dtype so bf16 params run a bf16 MXU matmul (no-op for f32).
    x_tile = x_ref[...].astype(w1_ref.dtype)        # (bt, D_in)

    # Layer 1: h1^T = W1 @ x^T, implemented as a contraction over dim 1 of both
    # operands -> (H1, bt), f32 accumulation on the MXU.  Batch stays on the lane axis.
    h1 = lax.dot_general(
        w1_ref[...], x_tile,
        dimension_numbers=(((1,), (1,)), ((), ())),
        preferred_element_type=jnp.float32)
    h1 = jnp.maximum(h1 + b1, 0.0)                  # (H1, bt)

    # Layer 2: h2^T = W2 @ h1^T + b2, ReLU.  Cast activations to the weight dtype.
    h2 = jnp.dot(w2_ref[...], h1.astype(w2_ref.dtype),
                 preferred_element_type=jnp.float32)
    h2 = jnp.maximum(h2 + b2, 0.0)                  # (H2, bt)

    # Layer 3 (out_features == 1): VPU broadcast-multiply + sublane (XLU) reduction
    # instead of a degenerate 1-row MXU matmul.  Lane-dense (1, bt) result.
    # TODO(synk): on v7x, consider moving this back onto the MXU if VALU/vst binds.
    w3_col = w3_ref[...].astype(jnp.float32)                 # (H2, 1)
    out = jnp.sum(h2 * w3_col, axis=0, keepdims=True) + b3   # (1, bt)

    o_ref[...] = out.astype(o_ref.dtype)


def _default_batch_tile(B):
    """Largest multiple of 128 dividing B that is <= min(4096, B // 2); else B.

    Gives grid >= 2 (DMA/compute overlap + v7x megacore sharding) with x tiles of a
    few hundred KiB, while small batches fall back to a single grid step.
    """
    cap = min(4096, B // 2)
    bt = (cap // 128) * 128
    while bt >= 128:
        if B % bt == 0:
            return bt
        bt -= 128
    return B


def simple_nn_forward(x, w1, b1, w2, b2, w3, b3, *, batch_tile=None):
    """Fused SimpleNN forward.

    x : (B, D_in)
    w1: (H1, D_in)  b1: (H1,)   -- PyTorch nn.Linear layout (out_features, in_features)
    w2: (H2, H1)    b2: (H2,)
    w3: (1, H2)     b3: (1,)
    returns: (B, 1)
    """
    B, D_in = x.shape
    H1, H2 = w1.shape[0], w2.shape[0]
    assert w1.shape == (H1, D_in) and w2.shape == (H2, H1) and w3.shape == (1, H2)

    if batch_tile is None:
        batch_tile = _default_batch_tile(B)
    assert B % batch_tile == 0, "batch must be divisible by batch_tile"
    # Output last dim is batch_tile (lane axis): tile must be the full dim or a
    # multiple of 128 (which also satisfies the sublane-8 rule for the x tile).
    assert batch_tile == B or batch_tile % 128 == 0, (
        "batch_tile must equal B or be a multiple of 128 (lane axis)")

    # VMEM guard (conservative for v7x: 64 MiB physical / 32 MiB scoped default).
    # Double-buffered x tile + out tile + resident params must fit comfortably.
    xbytes = 2 * batch_tile * D_in * x.dtype.itemsize
    pbytes = 2 * (w1.size * w1.dtype.itemsize + w2.size * w2.dtype.itemsize
                  + w3.size * w3.dtype.itemsize + 4 * (H1 + H2 + 1))
    obytes = 2 * batch_tile * x.dtype.itemsize
    assert xbytes + pbytes + obytes < 24 * 1024 * 1024, (
        "tile too large for a safe VMEM budget; pass a smaller batch_tile")

    # Layout plumbing outside the kernel: biases consolidated into one tiny DMA.
    w3_col = w3.reshape(H2, 1)                   # (H2, 1)
    b_all = jnp.concatenate(
        [b1.reshape(H1, 1), b2.reshape(H2, 1), b3.reshape(1, 1)], axis=0
    ).astype(jnp.float32)                        # (H1 + H2 + 1, 1)

    grid = (B // batch_tile,)
    # Weight/bias BlockSpecs return a constant block index, so Pallas does not re-DMA
    # them on later grid steps.
    out_T = pl.pallas_call(
        mlp_kernel,
        out_shape=jax.ShapeDtypeStruct((1, B), x.dtype),
        grid_spec=pltpu.PrefetchScalarGridSpec(
            num_scalar_prefetch=0,
            grid=grid,
            in_specs=[
                pl.BlockSpec((batch_tile, D_in), lambda i: (i, 0)),    # x tile (natural layout)
                pl.BlockSpec((H1, D_in), lambda i: (0, 0)),            # W1 (full, resident)
                pl.BlockSpec((H2, H1), lambda i: (0, 0)),              # W2 (full, resident)
                pl.BlockSpec((H2, 1), lambda i: (0, 0)),               # w3 column
                pl.BlockSpec((H1 + H2 + 1, 1), lambda i: (0, 0)),      # biases (concat)
            ],
            out_specs=pl.BlockSpec((1, batch_tile), lambda i: (0, i)),  # lane-dense out
        ),
        compiler_params=pltpu.CompilerParams(
            # grid >= 2 by default for large B, so v7x's two TensorCores both get work.
            dimension_semantics=("parallel",),
        ),
    )(x, w1, w2, w3_col, b_all)

    return out_T.reshape(B, 1)                   # metadata-only; matches PyTorch module


def _ref_forward(x, w1, b1, w2, b2, w3, b3):
    h = jnp.maximum(x @ w1.T + b1, 0.0)
    h = jnp.maximum(h @ w2.T + b2, 0.0)
    return h @ w3.T + b3


if __name__ == "__main__":
    # Small shapes consistent with the module: input_size=32, hidden1=32, hidden2=32, out=1
    batch, input_size, hidden1, hidden2 = 8, 32, 32, 32

    key = jax.random.PRNGKey(0)
    kx, k1, kb1, k2, kb2, k3, kb3, kx2 = jax.random.split(key, 8)

    x = jax.random.normal(kx, (batch, input_size), dtype=jnp.float32)

    # Parameters in PyTorch nn.Linear layout: weight (out_features, in_features), bias (out_features,)
    w1 = jax.random.normal(k1, (hidden1, input_size), dtype=jnp.float32) * 0.1
    b1 = jax.random.normal(kb1, (hidden1,), dtype=jnp.float32) * 0.1
    w2 = jax.random.normal(k2, (hidden2, hidden1), dtype=jnp.float32) * 0.1
    b2 = jax.random.normal(kb2, (hidden2,), dtype=jnp.float32) * 0.1
    w3 = jax.random.normal(k3, (1, hidden2), dtype=jnp.float32) * 0.1
    b3 = jax.random.normal(kb3, (1,), dtype=jnp.float32) * 0.1

    # Single-tile path (grid=(1,)): tiny batch.
    out = simple_nn_forward(x, w1, b1, w2, b2, w3, b3)
    out = jax.block_until_ready(out)
    ref = _ref_forward(x, w1, b1, w2, b2, w3, b3)
    assert out.shape == (batch, 1)
    assert jnp.allclose(out, ref, atol=1e-5, rtol=1e-5)

    # Tiled path (grid=(2,), batch_tile=128 picked by default): exercises pipelining
    # and the v7x megacore-friendly grid split.
    x_big = jax.random.normal(kx2, (256, input_size), dtype=jnp.float32)
    out_big = simple_nn_forward(x_big, w1, b1, w2, b2, w3, b3)
    out_big = jax.block_until_ready(out_big)
    ref_big = _ref_forward(x_big, w1, b1, w2, b2, w3, b3)
    assert out_big.shape == (256, 1)
    assert jnp.allclose(out_big, ref_big, atol=1e-5, rtol=1e-5)

    print("KERNEL_OK")
</pallas_src>

<mosaic_0001>
module attributes {stable_mosaic.version = 11 : i64} {
  func.func @mlp_kernel(%arg0: i32, %arg1: memref<8x32xf32, #tpu.memory_space<vmem>>, %arg2: memref<32x32xf32, #tpu.memory_space<vmem>>, %arg3: memref<32x32xf32, #tpu.memory_space<vmem>>, %arg4: memref<32x1xf32, #tpu.memory_space<vmem>>, %arg5: memref<65x1xf32, #tpu.memory_space<vmem>>, %arg6: memref<1x8xf32, #tpu.memory_space<vmem>>) attributes {dimension_semantics = [#tpu.dimension_semantics<parallel>], iteration_bounds = array<i64: 1>, scalar_prefetch = 0 : i64, scratch_operands = 0 : i64, tpu.core_type = #tpu.core_type<tc>, window_params = [{transform_indices = @transform_0, window_bounds = array<i64: 8, 32>}, {pipeline_mode = #tpu.pipeline_mode<synchronous>, transform_indices = @transform_1, window_bounds = array<i64: 32, 32>}, {pipeline_mode = #tpu.pipeline_mode<synchronous>, transform_indices = @transform_2, window_bounds = array<i64: 32, 32>}, {pipeline_mode = #tpu.pipeline_mode<synchronous>, transform_indices = @transform_3, window_bounds = array<i64: 32, 1>}, {pipeline_mode = #tpu.pipeline_mode<synchronous>, transform_indices = @transform_4, window_bounds = array<i64: 65, 1>}, {transform_indices = @transform_5, window_bounds = array<i64: 1, 8>}]} {
    %c0 = arith.constant 0 : index
    %c0_0 = arith.constant 0 : index
    %0 = vector.load %arg5[%c0, %c0_0] : memref<65x1xf32, #tpu.memory_space<vmem>>, vector<65x1xf32>
    %1 = vector.extract_strided_slice %0 {offsets = [0, 0], sizes = [32, 1], strides = [1, 1]} : vector<65x1xf32> to vector<32x1xf32>
    %2 = vector.extract_strided_slice %0 {offsets = [32, 0], sizes = [32, 1], strides = [1, 1]} : vector<65x1xf32> to vector<32x1xf32>
    %3 = vector.extract_strided_slice %0 {offsets = [64, 0], sizes = [1, 1], strides = [1, 1]} : vector<65x1xf32> to vector<1x1xf32>
    %c0_1 = arith.constant 0 : index
    %c0_2 = arith.constant 0 : index
    %4 = vector.load %arg1[%c0_1, %c0_2] : memref<8x32xf32, #tpu.memory_space<vmem>>, vector<8x32xf32>
    %c0_3 = arith.constant 0 : index
    %c0_4 = arith.constant 0 : index
    %5 = vector.load %arg2[%c0_3, %c0_4] : memref<32x32xf32, #tpu.memory_space<vmem>>, vector<32x32xf32>
    %cst = arith.constant dense<0.000000e+00> : vector<32x8xf32>
    %6 = tpu.matmul %5, %4, %cst {dimension_numbers = #tpu.dot_dimension_numbers<[1], [1], [0], [0], [0, 0, 1, 0], [], []>} : vector<32x32xf32>, vector<8x32xf32>, vector<32x8xf32> -> vector<32x8xf32>
    %7 = vector.broadcast %1 : vector<32x1xf32> to vector<32x8xf32>
    %8 = arith.addf %6, %7 : vector<32x8xf32>
    %cst_5 = arith.constant 0.000000e+00 : f32
    %9 = vector.broadcast %cst_5 : f32 to vector<32x8xf32>
    %10 = arith.maximumf %8, %9 : vector<32x8xf32>
    %c0_6 = arith.constant 0 : index
    %c0_7 = arith.constant 0 : index
    %11 = vector.load %arg3[%c0_6, %c0_7] : memref<32x32xf32, #tpu.memory_space<vmem>>, vector<32x32xf32>
    %cst_8 = arith.constant dense<0.000000e+00> : vector<32x8xf32>
    %12 = tpu.matmul %11, %10, %cst_8 {dimension_numbers = #tpu.dot_dimension_numbers<[1], [0], [0], [1], [0, 0, 1, 1], [], []>} : vector<32x32xf32>, vector<32x8xf32>, vector<32x8xf32> -> vector<32x8xf32>
    %13 = vector.broadcast %2 : vector<32x1xf32> to vector<32x8xf32>
    %14 = arith.addf %12, %13 : vector<32x8xf32>
    %cst_9 = arith.constant 0.000000e+00 : f32
    %15 = vector.broadcast %cst_9 : f32 to vector<32x8xf32>
    %16 = arith.maximumf %14, %15 : vector<32x8xf32>
    %c0_10 = arith.constant 0 : index
    %c0_11 = arith.constant 0 : index
    %17 = vector.load %arg4[%c0_10, %c0_11] : memref<32x1xf32, #tpu.memory_space<vmem>>, vector<32x1xf32>
    %18 = vector.broadcast %17 : vector<32x1xf32> to vector<32x8xf32>
    %19 = arith.mulf %16, %18 : vector<32x8xf32>
    %cst_12 = arith.constant dense<0.000000e+00> : vector<8xf32>
    %20 = vector.multi_reduction <add>, %19, %cst_12 [0] : vector<32x8xf32> to vector<8xf32>
    %21 = vector.shape_cast %20 : vector<8xf32> to vector<1x8xf32>
    %22 = vector.broadcast %3 : vector<1x1xf32> to vector<1x8xf32>
    %23 = arith.addf %21, %22 : vector<1x8xf32>
    %c0_13 = arith.constant 0 : index
    %c0_14 = arith.constant 0 : index
    %24 = vector.load %arg6[%c0_13, %c0_14] : memref<1x8xf32, #tpu.memory_space<vmem>>, vector<1x8xf32>
    tpu.vector_store %arg6[%c0_13, %c0_14], %23 {strides = array<i32>} : memref<1x8xf32, #tpu.memory_space<vmem>>, vector<1x8xf32>,
    return
  }
  func.func @transform_0(%arg0: i32) -> (i32, i32) {
    %c0_i32 = arith.constant 0 : i32
    %c0_i32_0 = arith.constant 0 : i32
    return %arg0, %c0_i32 : i32, i32
  }
  func.func @transform_1(%arg0: i32) -> (i32, i32) {
    %c0_i32 = arith.constant 0 : i32
    %c0_i32_0 = arith.constant 0 : i32
    %c0_i32_1 = arith.constant 0 : i32
    return %c0_i32, %c0_i32_0 : i32, i32
  }
  func.func @transform_2(%arg0: i32) -> (i32, i32) {
    %c0_i32 = arith.constant 0 : i32
    %c0_i32_0 = arith.constant 0 : i32
    %c0_i32_1 = arith.constant 0 : i32
    return %c0_i32, %c0_i32_0 : i32, i32
  }
  func.func @transform_3(%arg0: i32) -> (i32, i32) {
    %c0_i32 = arith.constant 0 : i32
    %c0_i32_0 = arith.constant 0 : i32
    %c0_i32_1 = arith.constant 0 : i32
    return %c0_i32, %c0_i32_0 : i32, i32
  }
  func.func @transform_4(%arg0: i32) -> (i32, i32) {
    %c0_i32 = arith.constant 0 : i32
    %c0_i32_0 = arith.constant 0 : i32
    %c0_i32_1 = arith.constant 0 : i32
    return %c0_i32, %c0_i32_0 : i32, i32
  }
  func.func @transform_5(%arg0: i32) -> (i32, i32) {
    %c0_i32 = arith.constant 0 : i32
    %c0_i32_0 = arith.constant 0 : i32
    return %c0_i32, %arg0 : i32, i32
  }
}

</mosaic_0001>

<llo_original>
// kernel: tpu_custom_call.1
$region0: #{tpu_custom_call.1}
  #allocation0 [shape = 'u32[]', space=smem, size = 0x4, offset = 0x4, fixed_abs, tag = 'smem constant byte address 0x4 - core index']
  #allocation1 [shape = 'u32[144,128]{1,0:T(1,128)}', space=vmem, size = 0x12000, scoped, tag = 'internal scratch']
  %s0 = inlined_call_operand.vmem [shape: f32[8,32], index: 0, kind: input, shape index: {}]
  %s1 = inlined_call_operand.vmem [shape: f32[32,32], index: 1, kind: input, shape index: {}]
  %s2 = inlined_call_operand.vmem [shape: f32[32,32], index: 2, kind: input, shape index: {}]
  %s3 = inlined_call_operand.vmem [shape: f32[32,1], index: 3, kind: input, shape index: {}]
  %s4 = inlined_call_operand.vmem [shape: f32[65,1], index: 4, kind: input, shape index: {}]
  %s5 = inlined_call_operand.hbm [shape: f32[1,8], index: 5, kind: output, shape index: {}]
  %s6 = sld [smem:[#allocation0]]
  $region30: #{tpu_custom_call.1} parent=0
    _
  %s8 = ssub.s32 1, %s6
  %s9 = scalar_select 0, %s8, %s6
  $region1: #{tpu_custom_call.1} parent=0
    #allocation2 [shape = 'u8[512]{0}', space=vmem, size = 0x400, scoped, tag = 'output window, operand 0, single buffered']
    #allocation3 [shape = 's32[1]{0}', space=sflag, size = 0x4, scoped, tag = 'scoped memory for tpu_custom_call.1']
    %10 = vsyncpa [#allocation3], 0
    // Predicated region
    $region2: #{tpu_custom_call.1} parent=1 // pred_check
      _
    $region3: #{tpu_custom_call.1} parent=1 // pred_check_branch
      %12 = sbr.rel (0) target = $region5
    $region4: #{tpu_custom_call.1} parent=1 // pred_region
      _
    $region5: #{tpu_custom_call.1} parent=1 // pred_fallthru
      _
    // Predicated region
    $region6: #{tpu_custom_call.1} parent=1 // pred_check
      _
    $region7: #{tpu_custom_call.1} parent=1 // pred_check_branch
      %14 = sbr.rel (0) target = $region9
    $region8: #{tpu_custom_call.1} parent=1 // pred_region
      _
    $region9: #{tpu_custom_call.1} parent=1 // pred_fallthru
      _
    // Predicated region
    $region10: #{tpu_custom_call.1} parent=1 // pred_check
      _
    $region11: #{tpu_custom_call.1} parent=1 // pred_check_branch
      %16 = sbr.rel (0) target = $region13
    $region12: #{tpu_custom_call.1} parent=1 // pred_region
      _
    $region13: #{tpu_custom_call.1} parent=1 // pred_fallthru
      _
    // Predicated region
    $region14: #{tpu_custom_call.1} parent=1 // pred_check
      _
    $region15: #{tpu_custom_call.1} parent=1 // pred_check_branch
      %18 = sbr.rel (0) target = $region17
    $region16: #{tpu_custom_call.1} parent=1 // pred_region
      _
    $region17: #{tpu_custom_call.1} parent=1 // pred_fallthru
      _
    // Predicated region
    $region18: #{tpu_custom_call.1} parent=1 // pred_check
      _
    $region19: #{tpu_custom_call.1} parent=1 // pred_check_branch
      %20 = sbr.rel (0) target = $region21
    $region20: #{tpu_custom_call.1} parent=1 // pred_region
      _
    $region21: #{tpu_custom_call.1} parent=1 // pred_fallthru
      _
    %v21 = vld [vmem:[%s4] sm:$0xff]
    %v22 = vld [vmem:[%s4 + $0x8] sm:$0xff]
    %v23 = vld [vmem:[%s4 + $0x10] sm:$0xff]
    %v24 = vld [vmem:[%s4 + $0x18] sm:$0xff]
    %v25 = vld [vmem:[%s4 + $0x20] sm:$0xff]
    %v26 = vld [vmem:[%s4 + $0x28] sm:$0xff]
    %v27 = vld [vmem:[%s4 + $0x30] sm:$0xff]
    %v28 = vld [vmem:[%s4 + $0x38] sm:$0xff]
    %v29 = vld [vmem:[%s4 + $0x40] sm:$0x1]
    %v30 = vld [vmem:[%s0] sm:$0xff]
    %v31 = vld [vmem:[%s1] sm:$0xff]
    %v32 = vld [vmem:[%s1 + $0x8] sm:$0xff]
    %v33 = vld [vmem:[%s1 + $0x10] sm:$0xff]
    %v34 = vld [vmem:[%s1 + $0x18] sm:$0xff]
    %36 = vset.pattern.permute.xlu0 0
    %37 = vperm.xlu0 %36, %v21
    %v38 = vpop.permute.xlu0 %37
    %41 = vset.pattern.permute.xlu0 0
    %42 = vperm.xlu0 %41, %v22
    %v43 = vpop.permute.xlu0 %42
    %46 = vset.pattern.permute.xlu0 0
    %47 = vperm.xlu0 %46, %v23
    %v48 = vpop.permute.xlu0 %47
    %51 = vset.pattern.permute.xlu0 0
    %52 = vperm.xlu0 %51, %v24
    %v53 = vpop.permute.xlu0 %52
    %vm55 = vcmask 261120
    %v57 = vsel %vm55, %v31, 0
    %v60 = vsel %vm55, %v32, 0
    %v63 = vsel %vm55, %v33, 0
    %v66 = vsel %vm55, %v34, 0
    %v69 = vsel %vm55, %v30, 0
    %71 = vmatprep.subr.mxu0 0.0
    %72 = vmatpush1.xpose.msra.mxu0 0.0
    %73 = vmatprep.subr.mxu0 0.0
    %74 = vmatpush1.xpose.msra.mxu0 0.0
    %75 = vmatprep.subr.mxu0 0.0
    %76 = vmatpush1.xpose.msra.mxu0 0.0
    %77 = vmatprep.subr.mxu0 0.0
    %78 = vmatpush1.xpose.msra.mxu0 0.0
    %79 = vmatprep.subr.mxu0 0.0
    %80 = vmatpush1.xpose.msra.mxu0 0.0
    %81 = vmatprep.subr.mxu0 0.0
    %82 = vmatpush1.xpose.msra.mxu0 0.0
    %83 = vmatprep.subr.mxu0 0.0
    %84 = vmatpush1.xpose.msra.mxu0 0.0
    %85 = vmatprep.subr.mxu0 0.0
    %86 = vmatpush1.xpose.msra.mxu0 0.0
    %87 = vmatprep.subr.mxu0 0.0
    %88 = vmatpush1.xpose.msra.mxu0 0.0
    %89 = vmatprep.subr.mxu0 0.0
    %90 = vmatpush1.xpose.msra.mxu0 0.0
    %91 = vmatprep.subr.mxu0 0.0
    %92 = vmatpush1.xpose.msra.mxu0 0.0
    %93 = vmatprep.subr.mxu0 0.0
    %94 = vmatpush1.xpose.msra.mxu0 0.0
    %95 = vmatprep.subr.mxu0 0.0
    %96 = vmatpush1.xpose.msra.mxu0 0.0
    %97 = vmatprep.subr.mxu0 0.0
    %98 = vmatpush1.xpose.msra.mxu0 0.0
    %99 = vmatprep.subr.mxu0 0.0
    %100 = vmatpush1.xpose.msra.mxu0 0.0
    %101 = vmatprep.subr.mxu0 0.0
    %102 = vmatpush1.xpose.msra.mxu0 %v69
    %103 = vmatprep.subr.mxu0 0.0
    %104 = vmatpush2.xpose.msra.mxu0 0.0
    %105 = vmatprep.subr.mxu0 0.0
    %106 = vmatpush2.xpose.msra.mxu0 0.0
    %107 = vmatprep.subr.mxu0 0.0
    %108 = vmatpush2.xpose.msra.mxu0 0.0
    %109 = vmatprep.subr.mxu0 0.0
    %110 = vmatpush2.xpose.msra.mxu0 0.0
    %111 = vmatprep.subr.mxu0 0.0
    %112 = vmatpush2.xpose.msra.mxu0 0.0
    %113 = vmatprep.subr.mxu0 0.0
    %114 = vmatpush2.xpose.msra.mxu0 0.0
    %115 = vmatprep.subr.mxu0 0.0
    %116 = vmatpush2.xpose.msra.mxu0 0.0
    %117 = vmatprep.subr.mxu0 0.0
    %118 = vmatpush2.xpose.msra.mxu0 0.0
    %119 = vmatprep.subr.mxu0 0.0
    %120 = vmatpush2.xpose.msra.mxu0 0.0
    %121 = vmatprep.subr.mxu0 0.0
    %122 = vmatpush2.xpose.msra.mxu0 0.0
    %123 = vmatprep.subr.mxu0 0.0
    %124 = vmatpush2.xpose.msra.mxu0 0.0
    %125 = vmatprep.subr.mxu0 0.0
    %126 = vmatpush2.xpose.msra.mxu0 0.0
    %127 = vmatprep.subr.mxu0 0.0
    %128 = vmatpush2.xpose.msra.mxu0 0.0
    %129 = vmatprep.subr.mxu0 0.0
    %130 = vmatpush2.xpose.msra.mxu0 0.0
    %131 = vmatprep.subr.mxu0 0.0
    %132 = vmatpush2.xpose.msra.mxu0 0.0
    %133 = vmatprep.subr.mxu0 0.0
    %134 = vmatpush2.xpose.msra.mxu0 0.0
    %135 = vmatprep.mubr.f32.mxu0 0.0
    %136 = vmatmul.mubr.f32.gmra.mxu0 %v57
    %v137 = vpop.f32.mrf.mxu0
    %v138 = vadd.f32 %v38, %v137
    %v139 = vpop.f32.mrf.mxu0
    %140 = vmatprep.mubr.f32.mxu0 0.0
    %141 = vmatmul.mubr.f32.gmra.mxu0 %v60
    %v142 = vpop.f32.mrf.mxu0
    %v143 = vadd.f32 %v43, %v142
    %v144 = vpop.f32.mrf.mxu0
    %145 = vmatprep.mubr.f32.mxu0 0.0
    %146 = vmatmul.mubr.f32.gmra.mxu0 %v63
    %v147 = vpop.f32.mrf.mxu0
    %v148 = vadd.f32 %v48, %v147
    %v149 = vpop.f32.mrf.mxu0
    %150 = vmatprep.mubr.f32.mxu0 0.0
    %151 = vmatmul.mubr.f32.gmra.mxu0 %v66
    %v152 = vpop.f32.mrf.mxu0
    %v153 = vadd.f32 %v53, %v152
    %v154 = vpop.f32.mrf.mxu0
    %155 = vdwg.mxu0
    %v156 = vmax.f32 %v138, 0.0
    %v157 = vmax.f32 %v143, 0.0
    %v158 = vmax.f32 %v148, 0.0
    %v159 = vmax.f32 %v153, 0.0
    %v160 = vld [vmem:[%s2] sm:$0xff]
    %v161 = vld [vmem:[%s2 + $0x8] sm:$0xff]
    %v162 = vld [vmem:[%s2 + $0x10] sm:$0xff]
    %v163 = vld [vmem:[%s2 + $0x18] sm:$0xff]
    %165 = vset.pattern.permute.xlu0 0
    %166 = vperm.xlu0 %165, %v25
    %v167 = vpop.permute.xlu0 %166
    %170 = vset.pattern.permute.xlu0 0
    %171 = vperm.xlu0 %170, %v26
    %v172 = vpop.permute.xlu0 %171
    %175 = vset.pattern.permute.xlu0 0
    %176 = vperm.xlu0 %175, %v27
    %v177 = vpop.permute.xlu0 %176
    %180 = vset.pattern.permute.xlu0 0
    %181 = vperm.xlu0 %180, %v28
    %v182 = vpop.permute.xlu0 %181
    %v185 = vsel %vm55, %v160, 0
    %v188 = vsel %vm55, %v161, 0
    %v191 = vsel %vm55, %v162, 0
    %v194 = vsel %vm55, %v163, 0
    %196 = vmatprep.subr.mxu0 0.0
    %197 = vmatpush1.msra.mxu0 0.0
    %198 = vmatprep.subr.mxu0 0.0
    %199 = vmatpush1.msra.mxu0 0.0
    %200 = vmatprep.subr.mxu0 0.0
    %201 = vmatpush1.msra.mxu0 0.0
    %202 = vmatprep.subr.mxu0 0.0
    %203 = vmatpush1.msra.mxu0 0.0
    %204 = vmatprep.subr.mxu0 0.0
    %205 = vmatpush1.msra.mxu0 0.0
    %206 = vmatprep.subr.mxu0 0.0
    %207 = vmatpush1.msra.mxu0 0.0
    %208 = vmatprep.subr.mxu0 0.0
    %209 = vmatpush1.msra.mxu0 0.0
    %210 = vmatprep.subr.mxu0 0.0
    %211 = vmatpush1.msra.mxu0 0.0
    %212 = vmatprep.subr.mxu0 0.0
    %213 = vmatpush1.msra.mxu0 0.0
    %214 = vmatprep.subr.mxu0 0.0
    %215 = vmatpush1.msra.mxu0 0.0
    %216 = vmatprep.subr.mxu0 0.0
    %217 = vmatpush1.msra.mxu0 0.0
    %218 = vmatprep.subr.mxu0 0.0
    %219 = vmatpush1.msra.mxu0 0.0
    %220 = vmatprep.subr.mxu0 0.0
    %221 = vmatpush1.msra.mxu0 %v159
    %222 = vmatprep.subr.mxu0 0.0
    %223 = vmatpush1.msra.mxu0 %v158
    %224 = vmatprep.subr.mxu0 0.0
    %225 = vmatpush1.msra.mxu0 %v157
    %226 = vmatprep.subr.mxu0 0.0
    %227 = vmatpush1.msra.mxu0 %v156
    %228 = vmatprep.subr.mxu0 0.0
    %229 = vmatpush2.msra.mxu0 0.0
    %230 = vmatprep.subr.mxu0 0.0
    %231 = vmatpush2.msra.mxu0 0.0
    %232 = vmatprep.subr.mxu0 0.0
    %233 = vmatpush2.msra.mxu0 0.0
    %234 = vmatprep.subr.mxu0 0.0
    %235 = vmatpush2.msra.mxu0 0.0
    %236 = vmatprep.subr.mxu0 0.0
    %237 = vmatpush2.msra.mxu0 0.0
    %238 = vmatprep.subr.mxu0 0.0
    %239 = vmatpush2.msra.mxu0 0.0
    %240 = vmatprep.subr.mxu0 0.0
    %241 = vmatpush2.msra.mxu0 0.0
    %242 = vmatprep.subr.mxu0 0.0
    %243 = vmatpush2.msra.mxu0 0.0
    %244 = vmatprep.subr.mxu0 0.0
    %245 = vmatpush2.msra.mxu0 0.0
    %246 = vmatprep.subr.mxu0 0.0
    %247 = vmatpush2.msra.mxu0 0.0
    %248 = vmatprep.subr.mxu0 0.0
    %249 = vmatpush2.msra.mxu0 0.0
    %250 = vmatprep.subr.mxu0 0.0
    %251 = vmatpush2.msra.mxu0 0.0
    %252 = vmatprep.subr.mxu0 0.0
    %253 = vmatpush2.msra.mxu0 0.0
    %254 = vmatprep.subr.mxu0 0.0
    %255 = vmatpush2.msra.mxu0 0.0
    %256 = vmatprep.subr.mxu0 0.0
    %257 = vmatpush2.msra.mxu0 0.0
    %258 = vmatprep.subr.mxu0 0.0
    %259 = vmatpush2.msra.mxu0 0.0
    %260 = vmatprep.mubr.f32.mxu0 0.0
    %261 = vmatmul.mubr.f32.gmra.mxu0 %v185
    %v262 = vpop.f32.mrf.mxu0
    %v263 = vadd.f32 %v167, %v262
    %v264 = vpop.f32.mrf.mxu0
    %265 = vmatprep.mubr.f32.mxu0 0.0
    %266 = vmatmul.mubr.f32.gmra.mxu0 %v188
    %v267 = vpop.f32.mrf.mxu0
    %v268 = vadd.f32 %v172, %v267
    %v269 = vpop.f32.mrf.mxu0
    %270 = vmatprep.mubr.f32.mxu0 0.0
    %271 = vmatmul.mubr.f32.gmra.mxu0 %v191
    %v272 = vpop.f32.mrf.mxu0
    %v273 = vadd.f32 %v177, %v272
    %v274 = vpop.f32.mrf.mxu0
    %275 = vmatprep.mubr.f32.mxu0 0.0
    %276 = vmatmul.mubr.f32.gmra.mxu0 %v194
    %v277 = vpop.f32.mrf.mxu0
    %v278 = vadd.f32 %v182, %v277
    %v279 = vpop.f32.mrf.mxu0
    %280 = vdwg.mxu0
    %v281 = vmax.f32 %v263, 0.0
    %v282 = vmax.f32 %v268, 0.0
    %v283 = vmax.f32 %v273, 0.0
    %v284 = vmax.f32 %v278, 0.0
    %v285 = vld [vmem:[%s3] sm:$0xff]
    %v286 = vld [vmem:[%s3 + $0x8] sm:$0xff]
    %v287 = vld [vmem:[%s3 + $0x10] sm:$0xff]
    %v288 = vld [vmem:[%s3 + $0x18] sm:$0xff]
    %290 = vset.pattern.permute.xlu0 0
    %291 = vperm.xlu0 %290, %v285
    %v292 = vpop.permute.xlu0 %291
    %295 = vset.pattern.permute.xlu0 0
    %296 = vperm.xlu0 %295, %v286
    %v297 = vpop.permute.xlu0 %296
    %300 = vset.pattern.permute.xlu0 0
    %301 = vperm.xlu0 %300, %v287
    %v302 = vpop.permute.xlu0 %301
    %305 = vset.pattern.permute.xlu0 0
    %306 = vperm.xlu0 %305, %v288
    %v307 = vpop.permute.xlu0 %306
    %v309 = vmul.f32 %v281, %v292
    %v310 = vmul.f32 %v282, %v297
    %v311 = vmul.f32 %v283, %v302
    %v312 = vmul.f32 %v284, %v307
    %vm313 = vcmask 64512
    %v314 = vsel %vm313, %v309, 0.0
    %v315 = vsel %vm313, %v310, 0.0
    %v316 = vadd.f32 %v314, %v315
    %v317 = vsel %vm313, %v311, 0.0
    %v318 = vadd.f32 %v316, %v317
    %v319 = vsel %vm313, %v312, 0.0
    %v320 = vadd.f32 %v318, %v319
    %v321 = vrot.slane %v320, 4
    %v322 = vadd.f32 %v320, %v321
    %v323 = vrot.slane %v322, 2
    %v324 = vadd.f32 %v322, %v323
    %v325 = vrot.slane %v324, 1
    %v326 = vadd.f32 %v324, %v325
    %328 = vset.pattern.permute.xlu0 0
    %329 = vperm.xlu0 %328, %v29
    %v330 = vpop.permute.xlu0 %329
    %v332 = vadd.f32 %v326, %v330
    %vm333 = vcmask 57344
    %334 = vst.msk [vmem:[#allocation2] sm:$0x1] %vm333, %v332
    // Predicated region
    $region22: #{tpu_custom_call.1} parent=1 // pred_check
      _
    $region23: #{tpu_custom_call.1} parent=1 // pred_check_branch
      %336 = sbr.rel (0) target = $region25
    $region24: #{tpu_custom_call.1} parent=1 // pred_region
      %s338 = ssub.s32 16, 16
      %339 = vsyncadd [#allocation3], %s338
      %s341 = sshll.u32 [#allocation2], 4
      %s342 = int_to_ptr.vmem [resolvable:$true] %s341
      %344 = dma.vmem_to_hbm [thread:$0]  %s342, 16, %s5, [#allocation3]
    $region25: #{tpu_custom_call.1} parent=1 // pred_fallthru
      _
    // Predicated region
    $region26: #{tpu_custom_call.1} parent=1 // pred_check
      _
    $region27: #{tpu_custom_call.1} parent=1 // pred_check_branch
      %346 = sbr.rel (0) target = $region29
    $region28: #{tpu_custom_call.1} parent=1 // pred_region
      %347 = dma.done [#allocation3], 16
    $region29: #{tpu_custom_call.1} parent=1 // pred_fallthru
      _
    %348 = vsyncpa [#allocation3], 1

</llo_original>
